<compile_context>
chip_gen: v6e
topology: v6e:2x2x1
jax: 0.10.0
libtpu: 0.0.40
codegen_flags: <defaults>
</compile_context>

<pallas_src>
import functools

import jax
import jax.numpy as jnp
from jax.experimental import pallas as pl
from jax.experimental.pallas import tpu as pltpu


def _soft_triplet_kernel(sel_ref, a_ref, p_ref, n_ref, out_ref, *,
                         rows_per_packed, block_rows, batch_total, needs_mask):
    """One batch tile (block_rows, Dp) -> one lane-dense (1, 128) block of
    per-lane partial sums. Lanes >= rows_per_packed hold junk (log 2 terms);
    the host-side reduction only reads lanes [0, rows_per_packed)."""
    i = pl.program_id(0)
    g = rows_per_packed

    a = a_ref[...]
    p = p_ref[...]
    n = n_ref[...]

    # Differences in the input dtype (bf16-native VPU on v6e/v7x keeps vreg and
    # VMEM pressure low); squaring / accumulation in f32.
    dp = (a - p).astype(jnp.float32)
    dn = (a - n).astype(jnp.float32)
    diff2 = dp * dp - dn * dn                                       # (tb, Dp)

    # Single fused grouped reduction on the MXU: lane j (< g) of the result is
    # d_pos - d_neg of original row (packed_row * g + j). sel is resident
    # (constant index_map), so this is one matmul per step with no per-step
    # selection-matrix setup.
    d = jnp.dot(diff2, sel_ref[...],
                preferred_element_type=jnp.float32)                 # (tb, 128)

    # Faithful to torch.log(1 + torch.exp(x)); like the PyTorch reference this
    # overflows to inf for d >~ 88 (a stable softplus would avoid that).
    losses = jnp.log(1.0 + jnp.exp(d))                              # (tb, 128)

    def _store(vals):
        # Sublane-only reduce; the cross-lane / cross-tile reduction is a tiny
        # host-side jnp.sum, keeping it off the per-step epilogue.
        out_ref[...] = jnp.sum(vals, axis=0, keepdims=True)

    if needs_mask:
        # Padded batch rows can only live in the final tile.
        last = pl.num_programs(0) - 1

        @pl.when(i == last)
        def _():
            tb = losses.shape[0]
            sub = jax.lax.broadcasted_iota(jnp.int32, (tb, 128), 0)
            lane = jax.lax.broadcasted_iota(jnp.int32, (tb, 128), 1)
            orig_row = (i * block_rows + sub) * g + lane
            _store(jnp.where(orig_row < batch_total, losses, 0.0))

        @pl.when(i != last)
        def _():
            _store(losses)
    else:
        _store(losses)


def _choose_block_rows(packed_rows, in_row_bytes, f32_row_bytes, sublane,
                       vmem_budget_bytes, max_block_rows, min_tiles):
    # Live VMEM per grid step:
    #   3 inputs x 2 pipeline buffers (input dtype)
    # + ~4 tile-sized f32 temporaries (dp, dn, diff2, d/losses) from the body.
    per_row = 6 * in_row_bytes + 4 * f32_row_bytes
    rows_budget = max(sublane, vmem_budget_bytes // per_row)

    block_rows = min(rows_budget, max_block_rows)
    # Keep >= min_tiles grid steps whenever the batch allows it, so the
    # pipeline can overlap DMA/compute and v7x's two TensorCores both get work.
    if packed_rows >= min_tiles * sublane:
        block_rows = min(block_rows, pl.cdiv(packed_rows, min_tiles))
    if block_rows >= packed_rows:
        return packed_rows                         # single full-extent block
    return max(sublane, (block_rows // sublane) * sublane)


def soft_triplet_loss(anchor, positive, negative, *,
                      vmem_budget_bytes=12 * 1024 * 1024,
                      max_block_rows=1024,
                      min_tiles=8):
    """Pallas implementation of SoftTripletLoss.forward (returns scalar mean loss).

    max_block_rows=1024 is a cross-generation sweet spot (512-row tiles already
    reach ~85% of HBM roofline); bump toward 2048 when tuning v7x specifically.
    """
    B, D = anchor.shape
    assert positive.shape == (B, D) and negative.shape == (B, D)

    # ---- lane-dense packing for small feature dims --------------------------
    if D < 128 and 128 % D == 0:
        g = 128 // D              # original rows per packed row
    else:
        g = 1
    Dp = g * D                    # packed feature width (lane dim)
    Bp = pl.cdiv(B, g)            # packed rows needed

    itemsize = jnp.dtype(anchor.dtype).itemsize
    sublane = max(8, 32 // itemsize)          # 8 for f32, 16 bf16, 32 int8/fp8
    in_row_bytes = Dp * itemsize
    f32_row_bytes = Dp * 4

    block_rows = _choose_block_rows(Bp, in_row_bytes, f32_row_bytes, sublane,
                                    vmem_budget_bytes, max_block_rows, min_tiles)
    num_tiles = pl.cdiv(Bp, block_rows)
    Bp_pad = num_tiles * block_rows
    B_pad = Bp_pad * g
    needs_mask = (B_pad != B)

    def prep(x):
        if B_pad != B:
            x = jnp.pad(x, ((0, B_pad - B), (0, 0)))
        return x.reshape(Bp_pad, Dp)          # contiguous row-major: free view

    a, p, n = prep(anchor), prep(positive), prep(negative)

    # Constant 0/1 selection matrix (Dp, 128). Column j (< g) selects the lanes
    # belonging to original row j within a packed row; columns >= g are zero.
    # Passed as a kernel input with a constant index_map so it is DMA'd once
    # and stays resident across all grid steps.
    lane = jnp.arange(128, dtype=jnp.int32)[None, :]
    feat = jnp.arange(Dp, dtype=jnp.int32)[:, None]
    sel = ((lane < g) & (feat // D == lane)).astype(jnp.float32)

    kernel = functools.partial(
        _soft_triplet_kernel,
        rows_per_packed=g, block_rows=block_rows,
        batch_total=B, needs_mask=needs_mask)

    in_spec = pl.BlockSpec((block_rows, Dp), lambda i: (i, 0))
    sel_spec = pl.BlockSpec((Dp, 128), lambda i: (0, 0))

    out = pl.pallas_call(
        kernel,
        out_shape=jax.ShapeDtypeStruct((1, num_tiles * 128), jnp.float32),
        grid_spec=pltpu.PrefetchScalarGridSpec(
            num_scalar_prefetch=0,
            grid=(num_tiles,),
            in_specs=[sel_spec, in_spec, in_spec, in_spec],
            # One lane-dense (1, 128) partial-sum block per grid step; no
            # resident accumulator, so the grid axis can be "parallel".
            out_specs=pl.BlockSpec((1, 128), lambda i: (0, i)),
        ),
        compiler_params=pltpu.CompilerParams(
            dimension_semantics=("parallel",),     # shards tiles across v7x TCs
            vmem_limit_bytes=32 * 1024 * 1024,     # >= scoped default everywhere
        ),
    )(sel, a, p, n)

    # Lanes [0, g) of each tile hold sublane-reduced partial sums; lanes >= g
    # carry junk (log 2 from the zero sel columns) and are simply ignored here.
    partial = out.reshape(num_tiles, 128)[:, :g]
    return jnp.sum(partial) / jnp.float32(B)


def _reference(anchor, positive, negative):
    """Pure-JAX reference matching the PyTorch SoftTripletLoss module."""
    d_pos = jnp.sum((anchor - positive) ** 2, axis=1)
    d_neg = jnp.sum((anchor - negative) ** 2, axis=1)
    losses = jnp.log(1.0 + jnp.exp(d_pos - d_neg))
    return jnp.mean(losses)


if __name__ == "__main__":
    key = jax.random.PRNGKey(0)

    def check(B, D, scale=1.0):
        k = jax.random.fold_in(key, B * 1000 + D)
        k1, k2, k3 = jax.random.split(k, 3)
        anchor = scale * jax.random.normal(k1, (B, D), dtype=jnp.float32)
        positive = scale * jax.random.normal(k2, (B, D), dtype=jnp.float32)
        negative = scale * jax.random.normal(k3, (B, D), dtype=jnp.float32)

        loss = jax.block_until_ready(soft_triplet_loss(anchor, positive, negative))
        ref = jax.block_until_ready(_reference(anchor, positive, negative))
        assert jnp.allclose(loss, ref, rtol=1e-4, atol=1e-5), (B, D, loss, ref)

    check(16, 32)           # demo shape: packed path, single tile
    check(50, 32)           # packed path + batch-padding mask (last-tile gate)
    check(300, 32)          # multi-tile "parallel" grid + padding mask
    check(24, 160, 0.25)    # g == 1 path (D does not pack into 128 lanes)
    print("KERNEL_OK")
</pallas_src>

<mosaic_0001>
module attributes {stable_mosaic.version = 11 : i64} {
  func.func @_soft_triplet_kernel(%arg0: i32, %arg1: memref<128x128xf32, #tpu.memory_space<vmem>>, %arg2: memref<4x128xf32, #tpu.memory_space<vmem>>, %arg3: memref<4x128xf32, #tpu.memory_space<vmem>>, %arg4: memref<4x128xf32, #tpu.memory_space<vmem>>, %arg5: memref<1x128xf32, #tpu.memory_space<vmem>>) attributes {dimension_semantics = [#tpu.dimension_semantics<parallel>], iteration_bounds = array<i64: 1>, scalar_prefetch = 0 : i64, scratch_operands = 0 : i64, tpu.core_type = #tpu.core_type<tc>, window_params = [{pipeline_mode = #tpu.pipeline_mode<synchronous>, transform_indices = @transform_0, window_bounds = array<i64: 128, 128>}, {transform_indices = @transform_1, window_bounds = array<i64: 4, 128>}, {transform_indices = @transform_2, window_bounds = array<i64: 4, 128>}, {transform_indices = @transform_3, window_bounds = array<i64: 4, 128>}, {transform_indices = @transform_4, window_bounds = array<i64: 1, 128>}]} {
    %c0 = arith.constant 0 : index
    %c0_0 = arith.constant 0 : index
    %0 = vector.load %arg2[%c0, %c0_0] : memref<4x128xf32, #tpu.memory_space<vmem>>, vector<4x128xf32>
    %c0_1 = arith.constant 0 : index
    %c0_2 = arith.constant 0 : index
    %1 = vector.load %arg3[%c0_1, %c0_2] : memref<4x128xf32, #tpu.memory_space<vmem>>, vector<4x128xf32>
    %c0_3 = arith.constant 0 : index
    %c0_4 = arith.constant 0 : index
    %2 = vector.load %arg4[%c0_3, %c0_4] : memref<4x128xf32, #tpu.memory_space<vmem>>, vector<4x128xf32>
    %3 = arith.subf %0, %1 : vector<4x128xf32>
    %4 = arith.subf %0, %2 : vector<4x128xf32>
    %5 = arith.mulf %3, %3 : vector<4x128xf32>
    %6 = arith.mulf %4, %4 : vector<4x128xf32>
    %7 = arith.subf %5, %6 : vector<4x128xf32>
    %c0_5 = arith.constant 0 : index
    %c0_6 = arith.constant 0 : index
    %8 = vector.load %arg1[%c0_5, %c0_6] : memref<128x128xf32, #tpu.memory_space<vmem>>, vector<128x128xf32>
    %cst = arith.constant dense<0.000000e+00> : vector<4x128xf32>
    %9 = tpu.matmul %7, %8, %cst {dimension_numbers = #tpu.dot_dimension_numbers<[1], [0], [0], [1], [0, 0, 1, 1], [], []>} : vector<4x128xf32>, vector<128x128xf32>, vector<4x128xf32> -> vector<4x128xf32>
    %10 = math.exp %9 : vector<4x128xf32>
    %cst_7 = arith.constant 1.000000e+00 : f32
    %11 = vector.broadcast %cst_7 : f32 to vector<4x128xf32>
    %12 = arith.addf %11, %10 : vector<4x128xf32>
    %13 = math.log %12 : vector<4x128xf32>
    %cst_8 = arith.constant dense<0.000000e+00> : vector<128xf32>
    %14 = vector.multi_reduction <add>, %13, %cst_8 [0] : vector<4x128xf32> to vector<128xf32>
    %15 = vector.shape_cast %14 : vector<128xf32> to vector<1x128xf32>
    %c0_9 = arith.constant 0 : index
    %c0_10 = arith.constant 0 : index
    %16 = vector.load %arg5[%c0_9, %c0_10] : memref<1x128xf32, #tpu.memory_space<vmem>>, vector<1x128xf32>
    tpu.vector_store %arg5[%c0_9, %c0_10], %15 {strides = array<i32>} : memref<1x128xf32, #tpu.memory_space<vmem>>, vector<1x128xf32>,
    return
  }
  func.func @transform_0(%arg0: i32) -> (i32, i32) {
    %c0_i32 = arith.constant 0 : i32
    %c0_i32_0 = arith.constant 0 : i32
    %c0_i32_1 = arith.constant 0 : i32
    return %c0_i32, %c0_i32_0 : i32, i32
  }
  func.func @transform_1(%arg0: i32) -> (i32, i32) {
    %c0_i32 = arith.constant 0 : i32
    %c0_i32_0 = arith.constant 0 : i32
    return %arg0, %c0_i32 : i32, i32
  }
  func.func @transform_2(%arg0: i32) -> (i32, i32) {
    %c0_i32 = arith.constant 0 : i32
    %c0_i32_0 = arith.constant 0 : i32
    return %arg0, %c0_i32 : i32, i32
  }
  func.func @transform_3(%arg0: i32) -> (i32, i32) {
    %c0_i32 = arith.constant 0 : i32
    %c0_i32_0 = arith.constant 0 : i32
    return %arg0, %c0_i32 : i32, i32
  }
  func.func @transform_4(%arg0: i32) -> (i32, i32) {
    %c0_i32 = arith.constant 0 : i32
    %c0_i32_0 = arith.constant 0 : i32
    return %c0_i32, %arg0 : i32, i32
  }
}

</mosaic_0001>

<llo_original>
// kernel: tpu_custom_call.1
$region0: #{tpu_custom_call.1}
  #allocation0 [shape = 'u32[]', space=smem, size = 0x4, offset = 0x4, fixed_abs, tag = 'smem constant byte address 0x4 - core index']
  #allocation1 [shape = 'u32[144,128]{1,0:T(1,128)}', space=vmem, size = 0x12000, scoped, tag = 'internal scratch']
  %s0 = inlined_call_operand.hbm [shape: f32[128,128], index: 0, kind: input, shape index: {}]
  %s1 = inlined_call_operand.hbm [shape: f32[4,128], index: 1, kind: input, shape index: {}]
  %s2 = inlined_call_operand.hbm [shape: f32[4,128], index: 2, kind: input, shape index: {}]
  %s3 = inlined_call_operand.vmem [shape: f32[4,128], index: 3, kind: input, shape index: {}]
  %s4 = inlined_call_operand.hbm [shape: f32[1,128], index: 4, kind: output, shape index: {}]
  %s5 = sld [smem:[#allocation0]]
  $region38: #{tpu_custom_call.1} parent=0
    _
  %s7 = ssub.s32 1, %s5
  %s8 = scalar_select 0, %s7, %s5
  $region1: #{tpu_custom_call.1} parent=0
    #allocation2 [shape = 'u8[65536]{0}', space=vmem, size = 0x10000, scoped, tag = 'input window, operand 0, single buffered']
    #allocation3 [shape = 's32[1]{0}', space=sflag, size = 0x4, scoped, tag = 'scoped memory for tpu_custom_call.1']
    #allocation4 [shape = 's32[1]{0}', space=sflag, size = 0x4, scoped, tag = 'scoped memory for tpu_custom_call.1']
    #allocation5 [shape = 'u8[2048]{0}', space=vmem, size = 0x800, scoped, tag = 'input window, operand 1, single buffered']
    #allocation6 [shape = 's32[1]{0}', space=sflag, size = 0x4, scoped, tag = 'scoped memory for tpu_custom_call.1']
    #allocation7 [shape = 'u8[2048]{0}', space=vmem, size = 0x800, scoped, tag = 'input window, operand 2, single buffered']
    #allocation8 [shape = 'u8[512]{0}', space=vmem, size = 0x400, scoped, tag = 'output window, operand 0, single buffered']
    %9 = vsyncpa [#allocation3], 0
    %10 = vsyncpa [#allocation6], 0
    %11 = vsyncpa [#allocation4], 0
    // Predicated region
    $region2: #{tpu_custom_call.1} parent=1 // pred_check
      _
    $region3: #{tpu_custom_call.1} parent=1 // pred_check_branch
      %13 = sbr.rel (0) target = $region5
    $region4: #{tpu_custom_call.1} parent=1 // pred_region
      %s15 = ssub.s32 2048, 2048
      %16 = vsyncadd [#allocation3], %s15
      %s17 = sshll.u32 [#allocation2], 4
      %s18 = int_to_ptr.vmem [resolvable:$true] %s17
      %23 = dma.hbm_to_vmem [thread:$0]  %s0, 2048, %s18, [#allocation3], 128, 128, 8
    $region5: #{tpu_custom_call.1} parent=1 // pred_fallthru
      _
    // Predicated region
    $region6: #{tpu_custom_call.1} parent=1 // pred_check
      _
    $region7: #{tpu_custom_call.1} parent=1 // pred_check_branch
      %25 = sbr.rel (0) target = $region9
    $region8: #{tpu_custom_call.1} parent=1 // pred_region
      %s27 = ssub.s32 64, 64
      %28 = vsyncadd [#allocation6], %s27
      %s30 = sshll.u32 [#allocation5], 4
      %s31 = int_to_ptr.vmem [resolvable:$true] %s30
      %33 = dma.hbm_to_vmem [thread:$0]  %s1, 64, %s31, [#allocation6]
    $region9: #{tpu_custom_call.1} parent=1 // pred_fallthru
      _
    // Predicated region
    $region10: #{tpu_custom_call.1} parent=1 // pred_check
      _
    $region11: #{tpu_custom_call.1} parent=1 // pred_check_branch
      %35 = sbr.rel (0) target = $region13
    $region12: #{tpu_custom_call.1} parent=1 // pred_region
      %s37 = ssub.s32 64, 64
      %38 = vsyncadd [#allocation6], %s37
      %s40 = sshll.u32 [#allocation7], 4
      %s41 = int_to_ptr.vmem [resolvable:$true] %s40
      %43 = dma.hbm_to_vmem [thread:$0]  %s2, 64, %s41, [#allocation6]
    $region13: #{tpu_custom_call.1} parent=1 // pred_fallthru
      _
    // Predicated region
    $region14: #{tpu_custom_call.1} parent=1 // pred_check
      _
    $region15: #{tpu_custom_call.1} parent=1 // pred_check_branch
      %45 = sbr.rel (0) target = $region17
    $region16: #{tpu_custom_call.1} parent=1 // pred_region
      _
    $region17: #{tpu_custom_call.1} parent=1 // pred_fallthru
      _
    // Predicated region
    $region18: #{tpu_custom_call.1} parent=1 // pred_check
      _
    $region19: #{tpu_custom_call.1} parent=1 // pred_check_branch
      %47 = sbr.rel (0) target = $region21
    $region20: #{tpu_custom_call.1} parent=1 // pred_region
      %48 = dma.done [#allocation3], 2048
    $region21: #{tpu_custom_call.1} parent=1 // pred_fallthru
      _
    // Predicated region
    $region22: #{tpu_custom_call.1} parent=1 // pred_check
      _
    $region23: #{tpu_custom_call.1} parent=1 // pred_check_branch
      %50 = sbr.rel (0) target = $region25
    $region24: #{tpu_custom_call.1} parent=1 // pred_region
      %51 = dma.done [#allocation6], 64
    $region25: #{tpu_custom_call.1} parent=1 // pred_fallthru
      _
    // Predicated region
    $region26: #{tpu_custom_call.1} parent=1 // pred_check
      _
    $region27: #{tpu_custom_call.1} parent=1 // pred_check_branch
      %53 = sbr.rel (0) target = $region29
    $region28: #{tpu_custom_call.1} parent=1 // pred_region
      %54 = dma.done [#allocation6], 64
    $region29: #{tpu_custom_call.1} parent=1 // pred_fallthru
      _
    %v55 = vld [vmem:[#allocation5] sm:$0xf]
    %v56 = vld [vmem:[#allocation7] sm:$0xf]
    %v57 = vld [vmem:[%s3] sm:$0xf]
    %v58 = vsub.f32 %v55, %v56
    %v59 = vsub.f32 %v55, %v57
    %v60 = vmul.f32 %v58, %v58
    %v61 = vmul.f32 %v59, %v59
    %v62 = vsub.f32 %v60, %v61
    %v63 = vld [vmem:[#allocation2] sm:$0xff]
    %v64 = vld [vmem:[#allocation2 + $0x8] sm:$0xff]
    %v65 = vld [vmem:[#allocation2 + $0x10] sm:$0xff]
    %v66 = vld [vmem:[#allocation2 + $0x18] sm:$0xff]
    %v67 = vld [vmem:[#allocation2 + $0x20] sm:$0xff]
    %v68 = vld [vmem:[#allocation2 + $0x28] sm:$0xff]
    %v69 = vld [vmem:[#allocation2 + $0x30] sm:$0xff]
    %v70 = vld [vmem:[#allocation2 + $0x38] sm:$0xff]
    %v71 = vld [vmem:[#allocation2 + $0x40] sm:$0xff]
    %v72 = vld [vmem:[#allocation2 + $0x48] sm:$0xff]
    %v73 = vld [vmem:[#allocation2 + $0x50] sm:$0xff]
    %v74 = vld [vmem:[#allocation2 + $0x58] sm:$0xff]
    %v75 = vld [vmem:[#allocation2 + $0x60] sm:$0xff]
    %v76 = vld [vmem:[#allocation2 + $0x68] sm:$0xff]
    %v77 = vld [vmem:[#allocation2 + $0x70] sm:$0xff]
    %v78 = vld [vmem:[#allocation2 + $0x78] sm:$0xff]
    %79 = vmatprep.subr.mxu0 0.0
    %80 = vmatpush1.msra.mxu0 %v78
    %81 = vmatprep.subr.mxu0 0.0
    %82 = vmatpush1.msra.mxu0 %v77
    %83 = vmatprep.subr.mxu0 0.0
    %84 = vmatpush1.msra.mxu0 %v76
    %85 = vmatprep.subr.mxu0 0.0
    %86 = vmatpush1.msra.mxu0 %v75
    %87 = vmatprep.subr.mxu0 0.0
    %88 = vmatpush1.msra.mxu0 %v74
    %89 = vmatprep.subr.mxu0 0.0
    %90 = vmatpush1.msra.mxu0 %v73
    %91 = vmatprep.subr.mxu0 0.0
    %92 = vmatpush1.msra.mxu0 %v72
    %93 = vmatprep.subr.mxu0 0.0
    %94 = vmatpush1.msra.mxu0 %v71
    %95 = vmatprep.subr.mxu0 0.0
    %96 = vmatpush1.msra.mxu0 %v70
    %97 = vmatprep.subr.mxu0 0.0
    %98 = vmatpush1.msra.mxu0 %v69
    %99 = vmatprep.subr.mxu0 0.0
    %100 = vmatpush1.msra.mxu0 %v68
    %101 = vmatprep.subr.mxu0 0.0
    %102 = vmatpush1.msra.mxu0 %v67
    %103 = vmatprep.subr.mxu0 0.0
    %104 = vmatpush1.msra.mxu0 %v66
    %105 = vmatprep.subr.mxu0 0.0
    %106 = vmatpush1.msra.mxu0 %v65
    %107 = vmatprep.subr.mxu0 0.0
    %108 = vmatpush1.msra.mxu0 %v64
    %109 = vmatprep.subr.mxu0 0.0
    %110 = vmatpush1.msra.mxu0 %v63
    %111 = vmatprep.subr.mxu0 0.0
    %112 = vmatpush2.msra.mxu0 0.0
    %113 = vmatprep.subr.mxu0 0.0
    %114 = vmatpush2.msra.mxu0 0.0
    %115 = vmatprep.subr.mxu0 0.0
    %116 = vmatpush2.msra.mxu0 0.0
    %117 = vmatprep.subr.mxu0 0.0
    %118 = vmatpush2.msra.mxu0 0.0
    %119 = vmatprep.subr.mxu0 0.0
    %120 = vmatpush2.msra.mxu0 0.0
    %121 = vmatprep.subr.mxu0 0.0
    %122 = vmatpush2.msra.mxu0 0.0
    %123 = vmatprep.subr.mxu0 0.0
    %124 = vmatpush2.msra.mxu0 0.0
    %125 = vmatprep.subr.mxu0 0.0
    %126 = vmatpush2.msra.mxu0 0.0
    %127 = vmatprep.subr.mxu0 0.0
    %128 = vmatpush2.msra.mxu0 0.0
    %129 = vmatprep.subr.mxu0 0.0
    %130 = vmatpush2.msra.mxu0 0.0
    %131 = vmatprep.subr.mxu0 0.0
    %132 = vmatpush2.msra.mxu0 0.0
    %133 = vmatprep.subr.mxu0 0.0
    %134 = vmatpush2.msra.mxu0 0.0
    %135 = vmatprep.subr.mxu0 0.0
    %136 = vmatpush2.msra.mxu0 0.0
    %137 = vmatprep.subr.mxu0 0.0
    %138 = vmatpush2.msra.mxu0 0.0
    %139 = vmatprep.subr.mxu0 0.0
    %140 = vmatpush2.msra.mxu0 0.0
    %141 = vmatprep.subr.mxu0 0.0
    %142 = vmatpush2.msra.mxu0 0.0
    %143 = vmatprep.mubr.f32.mxu0 0.0
    %144 = vmatmul.mubr.f32.gmra.mxu0 %v62
    %v145 = vpop.f32.mrf.mxu0
    %v146 = vadd.f32 0.0, %v145
    %v147 = vpop.f32.mrf.mxu0
    %148 = vdwg.mxu0
    %v149 = vmul.f32 %v146, 1.442695
    %v150 = vpow.pop %v149
    %v151 = vadd.f32 %v150, 1.0
    %v152 = vlog2.pop %v151
    %v153 = vmul.f32 %v152, 0.6931472
    %vm154 = vcmask 1043456
    %v155 = vsel %vm154, %v153, 0.0
    %v156 = vrot.slane %v155, 4
    %v157 = vadd.f32 %v155, %v156
    %v158 = vrot.slane %v157, 2
    %v159 = vadd.f32 %v157, %v158
    %v160 = vrot.slane %v159, 1
    %v161 = vadd.f32 %v159, %v160
    %162 = vst [vmem:[#allocation8] sm:$0x1] %v161
    // Predicated region
    $region30: #{tpu_custom_call.1} parent=1 // pred_check
      _
    $region31: #{tpu_custom_call.1} parent=1 // pred_check_branch
      %164 = sbr.rel (0) target = $region33
    $region32: #{tpu_custom_call.1} parent=1 // pred_region
      %s166 = ssub.s32 16, 16
      %167 = vsyncadd [#allocation4], %s166
      %s169 = sshll.u32 [#allocation8], 4
      %s170 = int_to_ptr.vmem [resolvable:$true] %s169
      %172 = dma.vmem_to_hbm [thread:$0]  %s170, 16, %s4, [#allocation4]
    $region33: #{tpu_custom_call.1} parent=1 // pred_fallthru
      _
    // Predicated region
    $region34: #{tpu_custom_call.1} parent=1 // pred_check
      _
    $region35: #{tpu_custom_call.1} parent=1 // pred_check_branch
      %174 = sbr.rel (0) target = $region37
    $region36: #{tpu_custom_call.1} parent=1 // pred_region
      %175 = dma.done [#allocation4], 16
    $region37: #{tpu_custom_call.1} parent=1 // pred_fallthru
      _
    %176 = vsyncpa [#allocation3], 1
    %177 = vsyncpa [#allocation6], 1
    %178 = vsyncpa [#allocation4], 1

</llo_original>
